<compile_context>
chip_gen: v5e
topology: v5e:2x2
jax: 0.10.0
libtpu: 0.0.40
codegen_flags: <defaults>
</compile_context>

<pallas_src>
import jax
import jax.numpy as jnp
from jax.experimental import pallas as pl
from jax.experimental.pallas import tpu as pltpu

_LANE = 128      # vreg lane width (last dim)
_SUBLANE = 8     # vreg sublane width (second-to-last dim, f32)


def _round_up(x, m):
    return ((x + m - 1) // m) * m


def _encode_project_kernel(x_ref, we_ref, be_ref, wp_ref, bp_ref, o_ref):
    # base_model.encode stand-in: h = tanh(x @ W_enc + b_enc)   (MXU + EUP)
    h = jnp.tanh(
        jnp.dot(x_ref[...], we_ref[...], preferred_element_type=jnp.float32)
        + be_ref[...]
    )
    # projection: y = h @ W_proj^T + b_proj   (W_proj pre-transposed to [in, out])
    y = (
        jnp.dot(h.astype(wp_ref.dtype), wp_ref[...],
                preferred_element_type=jnp.float32)
        + bp_ref[...]
    )
    o_ref[...] = y.astype(o_ref.dtype)


@jax.jit
def dimension_matching_forward(x, w_enc, b_enc, w_proj_t, b_proj):
    """x: [B, S, D_src] -> projected features [B, S, D_out]."""
    B, S, D_src = x.shape
    D_in = w_enc.shape[1]
    D_out = w_proj_t.shape[1]
    M = B * S

    # ---- lane-dense padding of all feature dims (zero-filled, sliced back) ----
    D_src_p = _round_up(D_src, _LANE)
    D_in_p = _round_up(D_in, _LANE)
    D_out_p = _round_up(D_out, _LANE)

    # ---- row tiling: big enough tiles to pipeline, bounded for v7x VMEM ----
    TILE_M = min(512, _round_up(M, _SUBLANE))
    M_p = _round_up(M, TILE_M)

    x2d = x.reshape(M, D_src)
    x_p = jnp.zeros((M_p, D_src_p), x.dtype).at[:M, :D_src].set(x2d)
    we_p = jnp.zeros((D_src_p, D_in_p), w_enc.dtype).at[:D_src, :D_in].set(w_enc)
    be_p = jnp.zeros((1, D_in_p), b_enc.dtype).at[:, :D_in].set(b_enc)
    wp_p = jnp.zeros((D_in_p, D_out_p), w_proj_t.dtype).at[:D_in, :D_out].set(w_proj_t)
    bp_p = jnp.zeros((1, D_out_p), b_proj.dtype).at[:, :D_out].set(b_proj)
    # Padded x cols are 0 and padded W_enc rows/cols are 0 => padded h cols are
    # tanh(0)=0; padded W_proj rows/cols and b_proj cols are 0 => padded output
    # lanes are 0 and are sliced away below. No leakage into real results.

    grid = (M_p // TILE_M,)

    out_p = pl.pallas_call(
        _encode_project_kernel,
        out_shape=jax.ShapeDtypeStruct((M_p, D_out_p), x.dtype),
        grid_spec=pl.GridSpec(
            grid=grid,
            in_specs=[
                pl.BlockSpec((TILE_M, D_src_p), lambda i: (i, 0)),   # x tile
                pl.BlockSpec((D_src_p, D_in_p), lambda i: (0, 0)),   # W_enc (resident)
                pl.BlockSpec((1, D_in_p), lambda i: (0, 0)),         # b_enc (resident)
                pl.BlockSpec((D_in_p, D_out_p), lambda i: (0, 0)),   # W_proj^T (resident)
                pl.BlockSpec((1, D_out_p), lambda i: (0, 0)),        # b_proj (resident)
            ],
            out_specs=pl.BlockSpec((TILE_M, D_out_p), lambda i: (i, 0)),
        ),
        compiler_params=pltpu.CompilerParams(
            dimension_semantics=("parallel",),           # data-parallel over rows
            vmem_limit_bytes=48 * 1024 * 1024,           # < v7x 64 MiB physical
        ),
    )(x_p, we_p, be_p, wp_p, bp_p)

    return out_p[:M, :D_out].reshape(B, S, D_out)


def _init_params(key, d_src, d_in, d_out, dtype=jnp.float32):
    """Deterministic PyTorch-style (uniform +-1/sqrt(fan_in)) init."""
    k0, k1, k2, k3 = jax.random.split(key, 4)
    lim_e = 1.0 / (d_src ** 0.5)
    lim_p = 1.0 / (d_in ** 0.5)
    # synthetic base encoder params (stand-in for base_model)
    w_enc = jax.random.uniform(k0, (d_src, d_in), dtype, -lim_e, lim_e)
    b_enc = jax.random.uniform(k1, (1, d_in), dtype, -lim_e, lim_e)
    # nn.Linear(input_dim, output_dim): weight [out, in] -> store transposed
    w_proj = jax.random.uniform(k2, (d_out, d_in), dtype, -lim_p, lim_p)
    b_proj = jax.random.uniform(k3, (1, d_out), dtype, -lim_p, lim_p)
    return w_enc, b_enc, w_proj.T, b_proj


if __name__ == "__main__":
    # TODO(synk): base_model is arbitrary in the original wrapper; a simple
    # deterministic linear+tanh encoder is used as a stand-in here.
    B, S = 2, 8          # batch, sequence
    D_SRC = 32           # raw input feature dim fed to base_model.encode
    D_IN = 32            # input_dim  (base model output dim)
    D_OUT = 64           # output_dim (projection target, self.d_model)

    key = jax.random.PRNGKey(0)
    kx, kp = jax.random.split(key)
    x = jax.random.normal(kx, (B, S, D_SRC), dtype=jnp.float32)
    w_enc, b_enc, w_proj_t, b_proj = _init_params(kp, D_SRC, D_IN, D_OUT)

    out = dimension_matching_forward(x, w_enc, b_enc, w_proj_t, b_proj)
    out = jax.block_until_ready(out)

    # pure-JAX reference for correctness
    h_ref = jnp.tanh(x.reshape(-1, D_SRC) @ w_enc + b_enc)
    ref = (h_ref @ w_proj_t + b_proj).reshape(B, S, D_OUT)
    assert out.shape == (B, S, D_OUT)
    assert jnp.allclose(out, ref, atol=1e-5, rtol=1e-5)

    print("KERNEL_OK")
</pallas_src>

<mosaic_0001>
module attributes {stable_mosaic.version = 11 : i64} {
  func.func @_encode_project_kernel(%arg0: i32, %arg1: memref<16x128xf32, #tpu.memory_space<vmem>>, %arg2: memref<128x128xf32, #tpu.memory_space<vmem>>, %arg3: memref<1x128xf32, #tpu.memory_space<vmem>>, %arg4: memref<128x128xf32, #tpu.memory_space<vmem>>, %arg5: memref<1x128xf32, #tpu.memory_space<vmem>>, %arg6: memref<16x128xf32, #tpu.memory_space<vmem>>) attributes {dimension_semantics = [#tpu.dimension_semantics<parallel>], iteration_bounds = array<i64: 1>, scalar_prefetch = 0 : i64, scratch_operands = 0 : i64, tpu.core_type = #tpu.core_type<tc>, window_params = [{transform_indices = @transform_0, window_bounds = array<i64: 16, 128>}, {pipeline_mode = #tpu.pipeline_mode<synchronous>, transform_indices = @transform_1, window_bounds = array<i64: 128, 128>}, {pipeline_mode = #tpu.pipeline_mode<synchronous>, transform_indices = @transform_2, window_bounds = array<i64: 1, 128>}, {pipeline_mode = #tpu.pipeline_mode<synchronous>, transform_indices = @transform_3, window_bounds = array<i64: 128, 128>}, {pipeline_mode = #tpu.pipeline_mode<synchronous>, transform_indices = @transform_4, window_bounds = array<i64: 1, 128>}, {transform_indices = @transform_5, window_bounds = array<i64: 16, 128>}]} {
    %c0 = arith.constant 0 : index
    %c0_0 = arith.constant 0 : index
    %0 = vector.load %arg1[%c0, %c0_0] : memref<16x128xf32, #tpu.memory_space<vmem>>, vector<16x128xf32>
    %c0_1 = arith.constant 0 : index
    %c0_2 = arith.constant 0 : index
    %1 = vector.load %arg2[%c0_1, %c0_2] : memref<128x128xf32, #tpu.memory_space<vmem>>, vector<128x128xf32>
    %cst = arith.constant dense<0.000000e+00> : vector<16x128xf32>
    %2 = tpu.matmul %0, %1, %cst {dimension_numbers = #tpu.dot_dimension_numbers<[1], [0], [0], [1], [0, 0, 1, 1], [], []>} : vector<16x128xf32>, vector<128x128xf32>, vector<16x128xf32> -> vector<16x128xf32>
    %c0_3 = arith.constant 0 : index
    %c0_4 = arith.constant 0 : index
    %3 = vector.load %arg3[%c0_3, %c0_4] : memref<1x128xf32, #tpu.memory_space<vmem>>, vector<1x128xf32>
    %4 = vector.broadcast %3 : vector<1x128xf32> to vector<16x128xf32>
    %5 = arith.addf %2, %4 : vector<16x128xf32>
    %6 = math.tanh %5 : vector<16x128xf32>
    %c0_5 = arith.constant 0 : index
    %c0_6 = arith.constant 0 : index
    %7 = vector.load %arg4[%c0_5, %c0_6] : memref<128x128xf32, #tpu.memory_space<vmem>>, vector<128x128xf32>
    %cst_7 = arith.constant dense<0.000000e+00> : vector<16x128xf32>
    %8 = tpu.matmul %6, %7, %cst_7 {dimension_numbers = #tpu.dot_dimension_numbers<[1], [0], [0], [1], [0, 0, 1, 1], [], []>} : vector<16x128xf32>, vector<128x128xf32>, vector<16x128xf32> -> vector<16x128xf32>
    %c0_8 = arith.constant 0 : index
    %c0_9 = arith.constant 0 : index
    %9 = vector.load %arg5[%c0_8, %c0_9] : memref<1x128xf32, #tpu.memory_space<vmem>>, vector<1x128xf32>
    %10 = vector.broadcast %9 : vector<1x128xf32> to vector<16x128xf32>
    %11 = arith.addf %8, %10 : vector<16x128xf32>
    %c0_10 = arith.constant 0 : index
    %c0_11 = arith.constant 0 : index
    %12 = vector.load %arg6[%c0_10, %c0_11] : memref<16x128xf32, #tpu.memory_space<vmem>>, vector<16x128xf32>
    tpu.vector_store %arg6[%c0_10, %c0_11], %11 {strides = array<i32>} : memref<16x128xf32, #tpu.memory_space<vmem>>, vector<16x128xf32>,
    return
  }
  func.func @transform_0(%arg0: i32) -> (i32, i32) {
    %c0_i32 = arith.constant 0 : i32
    %c0_i32_0 = arith.constant 0 : i32
    return %arg0, %c0_i32 : i32, i32
  }
  func.func @transform_1(%arg0: i32) -> (i32, i32) {
    %c0_i32 = arith.constant 0 : i32
    %c0_i32_0 = arith.constant 0 : i32
    %c0_i32_1 = arith.constant 0 : i32
    return %c0_i32, %c0_i32_0 : i32, i32
  }
  func.func @transform_2(%arg0: i32) -> (i32, i32) {
    %c0_i32 = arith.constant 0 : i32
    %c0_i32_0 = arith.constant 0 : i32
    %c0_i32_1 = arith.constant 0 : i32
    return %c0_i32, %c0_i32_0 : i32, i32
  }
  func.func @transform_3(%arg0: i32) -> (i32, i32) {
    %c0_i32 = arith.constant 0 : i32
    %c0_i32_0 = arith.constant 0 : i32
    %c0_i32_1 = arith.constant 0 : i32
    return %c0_i32, %c0_i32_0 : i32, i32
  }
  func.func @transform_4(%arg0: i32) -> (i32, i32) {
    %c0_i32 = arith.constant 0 : i32
    %c0_i32_0 = arith.constant 0 : i32
    %c0_i32_1 = arith.constant 0 : i32
    return %c0_i32, %c0_i32_0 : i32, i32
  }
  func.func @transform_5(%arg0: i32) -> (i32, i32) {
    %c0_i32 = arith.constant 0 : i32
    %c0_i32_0 = arith.constant 0 : i32
    return %arg0, %c0_i32 : i32, i32
  }
}

</mosaic_0001>

<llo_original>
// kernel: dimension_matching_forward.1
$region0: #{dimension_matching_forward.1}
  #allocation0 [shape = 'u32[]', space=smem, size = 0x4, offset = 0x4, fixed_abs, tag = 'smem constant byte address 0x4 - core index']
  #allocation1 [shape = 'u32[72,128]{1,0:T(1,128)}', space=vmem, size = 0x9000, scoped, tag = 'internal scratch']
  %s0 = inlined_call_operand.vmem [shape: f32[16,128], index: 0, kind: input, shape index: {}]
  %s1 = inlined_call_operand.vmem [shape: f32[128,128], index: 1, kind: input, shape index: {}]
  %s2 = inlined_call_operand.vmem [shape: f32[1,128], index: 2, kind: input, shape index: {}]
  %s3 = inlined_call_operand.vmem [shape: f32[128,128], index: 3, kind: input, shape index: {}]
  %s4 = inlined_call_operand.vmem [shape: f32[1,128], index: 4, kind: input, shape index: {}]
  %s5 = inlined_call_operand.vmem [shape: f32[16,128], index: 5, kind: output, shape index: {}]
  %s6 = sld [smem:[#allocation0]]
  $region30: #{dimension_matching_forward.1} parent=0
    _
  %s8 = ssub.s32 1, %s6
  %s9 = scalar_select 0, %s8, %s6
  // Predicated region
  $region2: #{dimension_matching_forward.1} parent=0 // pred_check
    _
  $region3: #{dimension_matching_forward.1} parent=0 // pred_check_branch
    %11 = sbr.rel (0) target = $region5
  $region4: #{dimension_matching_forward.1} parent=0 // pred_region
    _
  $region5: #{dimension_matching_forward.1} parent=0 // pred_fallthru
    _
  // Predicated region
  $region6: #{dimension_matching_forward.1} parent=0 // pred_check
    _
  $region7: #{dimension_matching_forward.1} parent=0 // pred_check_branch
    %13 = sbr.rel (0) target = $region9
  $region8: #{dimension_matching_forward.1} parent=0 // pred_region
    _
  $region9: #{dimension_matching_forward.1} parent=0 // pred_fallthru
    _
  // Predicated region
  $region10: #{dimension_matching_forward.1} parent=0 // pred_check
    _
  $region11: #{dimension_matching_forward.1} parent=0 // pred_check_branch
    %15 = sbr.rel (0) target = $region13
  $region12: #{dimension_matching_forward.1} parent=0 // pred_region
    _
  $region13: #{dimension_matching_forward.1} parent=0 // pred_fallthru
    _
  // Predicated region
  $region14: #{dimension_matching_forward.1} parent=0 // pred_check
    _
  $region15: #{dimension_matching_forward.1} parent=0 // pred_check_branch
    %17 = sbr.rel (0) target = $region17
  $region16: #{dimension_matching_forward.1} parent=0 // pred_region
    _
  $region17: #{dimension_matching_forward.1} parent=0 // pred_fallthru
    _
  // Predicated region
  $region18: #{dimension_matching_forward.1} parent=0 // pred_check
    _
  $region19: #{dimension_matching_forward.1} parent=0 // pred_check_branch
    %19 = sbr.rel (0) target = $region21
  $region20: #{dimension_matching_forward.1} parent=0 // pred_region
    _
  $region21: #{dimension_matching_forward.1} parent=0 // pred_fallthru
    _
  %v20 = vld [vmem:[%s0] sm:$0xff]
  %v21 = vld [vmem:[%s0 + $0x8] sm:$0xff]
  %v22 = vld [vmem:[%s1] sm:$0xff]
  %v23 = vld [vmem:[%s1 + $0x8] sm:$0xff]
  %v24 = vld [vmem:[%s1 + $0x10] sm:$0xff]
  %v25 = vld [vmem:[%s1 + $0x18] sm:$0xff]
  %v26 = vld [vmem:[%s1 + $0x20] sm:$0xff]
  %v27 = vld [vmem:[%s1 + $0x28] sm:$0xff]
  %v28 = vld [vmem:[%s1 + $0x30] sm:$0xff]
  %v29 = vld [vmem:[%s1 + $0x38] sm:$0xff]
  %v30 = vld [vmem:[%s1 + $0x40] sm:$0xff]
  %v31 = vld [vmem:[%s1 + $0x48] sm:$0xff]
  %v32 = vld [vmem:[%s1 + $0x50] sm:$0xff]
  %v33 = vld [vmem:[%s1 + $0x58] sm:$0xff]
  %v34 = vld [vmem:[%s1 + $0x60] sm:$0xff]
  %v35 = vld [vmem:[%s1 + $0x68] sm:$0xff]
  %v36 = vld [vmem:[%s1 + $0x70] sm:$0xff]
  %v37 = vld [vmem:[%s1 + $0x78] sm:$0xff]
  %v38 = vld [vmem:[%s2] sm:$0x1]
  %v40 = vperm.slane %v38, 0
  %42 = vmatpush.msra.mxu0 %v37
  %43 = vmatpush.msra.mxu0 %v36
  %44 = vmatpush.msra.mxu0 %v35
  %45 = vmatpush.msra.mxu0 %v34
  %46 = vmatpush.msra.mxu0 %v33
  %47 = vmatpush.msra.mxu0 %v32
  %48 = vmatpush.msra.mxu0 %v31
  %49 = vmatpush.msra.mxu0 %v30
  %50 = vmatpush.msra.mxu0 %v29
  %51 = vmatpush.msra.mxu0 %v28
  %52 = vmatpush.msra.mxu0 %v27
  %53 = vmatpush.msra.mxu0 %v26
  %54 = vmatpush.msra.mxu0 %v25
  %55 = vmatpush.msra.mxu0 %v24
  %56 = vmatpush.msra.mxu0 %v23
  %57 = vmatpush.msra.mxu0 %v22
  %58 = vmatmul.f32.gmra.mxu0 %v20
  %v59 = vpop.f32.mrf.mxu0
  %v60 = vadd.f32 %v40, %v59
  %61 = vmatmul.f32.gmra.mxu0 %v21
  %v62 = vpop.f32.mrf.mxu0
  %v63 = vadd.f32 %v40, %v62
  %64 = vdwg.mxu0
  %v65 = vtanh.pop %v60
  %v66 = vtanh.pop %v63
  %v67 = vld [vmem:[%s3] sm:$0xff]
  %v68 = vld [vmem:[%s3 + $0x8] sm:$0xff]
  %v69 = vld [vmem:[%s3 + $0x10] sm:$0xff]
  %v70 = vld [vmem:[%s3 + $0x18] sm:$0xff]
  %v71 = vld [vmem:[%s3 + $0x20] sm:$0xff]
  %v72 = vld [vmem:[%s3 + $0x28] sm:$0xff]
  %v73 = vld [vmem:[%s3 + $0x30] sm:$0xff]
  %v74 = vld [vmem:[%s3 + $0x38] sm:$0xff]
  %v75 = vld [vmem:[%s3 + $0x40] sm:$0xff]
  %v76 = vld [vmem:[%s3 + $0x48] sm:$0xff]
  %v77 = vld [vmem:[%s3 + $0x50] sm:$0xff]
  %v78 = vld [vmem:[%s3 + $0x58] sm:$0xff]
  %v79 = vld [vmem:[%s3 + $0x60] sm:$0xff]
  %v80 = vld [vmem:[%s3 + $0x68] sm:$0xff]
  %v81 = vld [vmem:[%s3 + $0x70] sm:$0xff]
  %v82 = vld [vmem:[%s3 + $0x78] sm:$0xff]
  %v83 = vld [vmem:[%s4] sm:$0x1]
  %v85 = vperm.slane %v83, 0
  %87 = vmatpush.msra.mxu0 %v82
  %88 = vmatpush.msra.mxu0 %v81
  %89 = vmatpush.msra.mxu0 %v80
  %90 = vmatpush.msra.mxu0 %v79
  %91 = vmatpush.msra.mxu0 %v78
  %92 = vmatpush.msra.mxu0 %v77
  %93 = vmatpush.msra.mxu0 %v76
  %94 = vmatpush.msra.mxu0 %v75
  %95 = vmatpush.msra.mxu0 %v74
  %96 = vmatpush.msra.mxu0 %v73
  %97 = vmatpush.msra.mxu0 %v72
  %98 = vmatpush.msra.mxu0 %v71
  %99 = vmatpush.msra.mxu0 %v70
  %100 = vmatpush.msra.mxu0 %v69
  %101 = vmatpush.msra.mxu0 %v68
  %102 = vmatpush.msra.mxu0 %v67
  %103 = vmatmul.f32.gmra.mxu0 %v65
  %v104 = vpop.f32.mrf.mxu0
  %v105 = vadd.f32 %v85, %v104
  %106 = vmatmul.f32.gmra.mxu0 %v66
  %v107 = vpop.f32.mrf.mxu0
  %v108 = vadd.f32 %v85, %v107
  %109 = vdwg.mxu0
  %110 = vst [vmem:[%s5] sm:$0xff] %v105
  %111 = vst [vmem:[%s5 + $0x8] sm:$0xff] %v108
  // Predicated region
  $region22: #{dimension_matching_forward.1} parent=0 // pred_check
    _
  $region23: #{dimension_matching_forward.1} parent=0 // pred_check_branch
    %113 = sbr.rel (0) target = $region25
  $region24: #{dimension_matching_forward.1} parent=0 // pred_region
    _
  $region25: #{dimension_matching_forward.1} parent=0 // pred_fallthru
    _
  // Predicated region
  $region26: #{dimension_matching_forward.1} parent=0 // pred_check
    _
  $region27: #{dimension_matching_forward.1} parent=0 // pred_check_branch
    %115 = sbr.rel (0) target = $region29
  $region28: #{dimension_matching_forward.1} parent=0 // pred_region
    _
  $region29: #{dimension_matching_forward.1} parent=0 // pred_fallthru
    _

</llo_original>
